<compile_context>
chip_gen: v5e
topology: v5e:2x2
jax: 0.10.0
libtpu: 0.0.40
codegen_flags: <defaults>
</compile_context>

<pallas_src>
import functools

import jax
import jax.numpy as jnp
from jax.experimental import pallas as pl
from jax.experimental.pallas import tpu as pltpu

LANES = 128
SUBLANES = 8
_ALIGN = LANES * SUBLANES          # 1024 f32 elements = one full (8,128) vreg
_PALLAS_MIN_BYTES = 1 << 20        # below this a plain XLA slice wins


def _round_up(x: int, m: int) -> int:
    return ((x + m - 1) // m) * m


def _dma_copy_kernel(needed_rows, src_hbm, dst_hbm, sem):
    # Single HBM->HBM DMA of the sublane-aligned prefix covering `size`.
    # No grid, no VMEM round trip, no vld/vst work on the TensorCore.
    cp = pltpu.make_async_copy(src_hbm.at[:needed_rows], dst_hbm, sem)
    cp.start()
    cp.wait()


def history_forward(storage_padded: jax.Array, size: int,
                    *, force_pallas: bool = False) -> jax.Array:
    """Pallas equivalent of DiscriminatorOutputHistory.forward() == buffer[:size].

    Args:
      storage_padded: float32 (padded_len,), padded_len % 1024 == 0.  The
        logical history buffer lives in the leading entries.
      size: concrete Python int, number of valid entries.
      force_pallas: run the Pallas DMA kernel even for tiny sizes (used by the
        demo; by default small copies take the plain-XLA fast path).
    Returns:
      float32 array of shape (size,) == buffer[:size].
    """
    padded_len = storage_padded.shape[0]
    assert padded_len % _ALIGN == 0
    size = int(size)

    if size == 0:
        return storage_padded[:0]

    # Fast path: sub-MiB copies are dominated by fixed kernel-launch cost.
    if not force_pallas and size * storage_padded.dtype.itemsize < _PALLAS_MIN_BYTES:
        return storage_padded[:size]

    rows = padded_len // LANES                       # multiple of SUBLANES
    needed_rows = min(rows, _round_up(pl.cdiv(size, LANES), SUBLANES))
    needed_rows = max(needed_rows, SUBLANES)

    # Contiguous storage presented as lane-dense (rows, 128); the DMA copies a
    # contiguous, (8,128)-aligned prefix of it.
    buf2d = storage_padded.reshape(rows, LANES)

    copied = pl.pallas_call(
        functools.partial(_dma_copy_kernel, needed_rows),
        out_shape=jax.ShapeDtypeStruct((needed_rows, LANES), storage_padded.dtype),
        in_specs=[pl.BlockSpec(memory_space=pl.ANY)],
        out_specs=pl.BlockSpec(memory_space=pl.ANY),
        scratch_shapes=[pltpu.SemaphoreType.DMA(())],
    )(buf2d)

    # Static prefix slice -> exactly buffer[:size].
    return copied.reshape(-1)[:size]


# ----------------------------------------------------------------------------
# Plain-JAX replica of the module's stateful init / update (glue only).
# ----------------------------------------------------------------------------
class HistoryState:
    def __init__(self, max_size: int):
        self.max_size = max_size
        self.logical_len = max(1, max_size)
        padded_len = _round_up(self.logical_len, _ALIGN)
        # Lane/sublane-dense padded storage; logical buffer = storage[:logical_len].
        self.storage = jnp.zeros((padded_len,), dtype=jnp.float32)
        self.size = 0

    def update(self, batch: jax.Array):
        batch_size = int(batch.shape[0])
        excess = max(0, self.size + batch_size - self.max_size)
        if excess > 0:
            if excess >= self.size:
                # Everything currently stored is evicted (clamped so size
                # never goes negative -- fixes the original FIFO bug when
                # batch_size > max_size).
                self.size = 0
            else:
                keep = self.size - excess
                self.storage = self.storage.at[:keep].set(
                    self.storage[excess:self.size])
                self.size = keep
        num_new = min(batch_size, self.max_size)
        if num_new > 0:
            self.storage = self.storage.at[self.size:self.size + num_new].set(
                batch[-num_new:])
        self.size += num_new

    def forward(self, *, force_pallas: bool = False):
        return history_forward(self.storage, self.size, force_pallas=force_pallas)


if __name__ == "__main__":
    key = jax.random.PRNGKey(0)
    max_size = 32            # max history length
    batch = 8                # discriminator outputs per update

    hist = HistoryState(max_size)

    k1, k2 = jax.random.split(key)
    batch1 = jax.random.normal(k1, (batch,), dtype=jnp.float32)
    batch2 = jax.random.normal(k2, (batch,), dtype=jnp.float32)
    hist.update(batch1)
    hist.update(batch2)      # size is now 16

    # Force the Pallas DMA path so the kernel is actually exercised
    # (the default heuristic would take the plain-slice fast path here).
    out = hist.forward(force_pallas=True)
    out = jax.block_until_ready(out)

    # Sanity check against the reference semantics buffer[:size].
    ref = hist.storage[:hist.size]
    assert out.shape == (hist.size,)
    assert out.dtype == jnp.float32
    assert bool(jnp.allclose(out, ref)), "kernel output mismatch"

    # Fast (non-Pallas) path must match as well.
    out_fast = jax.block_until_ready(hist.forward())
    assert bool(jnp.allclose(out_fast, ref)), "fast-path output mismatch"

    print("KERNEL_OK")
</pallas_src>

<mosaic_0001>
module attributes {stable_mosaic.version = 11 : i64} {
  func.func @_dma_copy_kernel(%arg0: memref<8x128xf32, #tpu.memory_space<any>>, %arg1: memref<8x128xf32, #tpu.memory_space<any>>, %arg2: memref<!tpu.dma_semaphore, #tpu.memory_space<semaphore_mem>>) attributes {dimension_semantics = [], scalar_prefetch = 0 : i64, scratch_operands = 1 : i64, tpu.core_type = #tpu.core_type<tc>} {
    %c0_i32 = arith.constant 0 : i32
    %c0_i32_0 = arith.constant 0 : i32
    %0 = tpu.memref_slice %arg0[%c0_i32, %c0_i32_0] : memref<8x128xf32, #tpu.memory_space<any>> -> memref<8x128xf32, #tpu.memory_space<any>>
    tpu.enqueue_dma source(%0 : memref<8x128xf32, #tpu.memory_space<any>>) target(%arg1 : memref<8x128xf32, #tpu.memory_space<any>>) target_semaphore(%arg2 : memref<!tpu.dma_semaphore, #tpu.memory_space<semaphore_mem>>)
    %c0_i32_1 = arith.constant 0 : i32
    %c0_i32_2 = arith.constant 0 : i32
    %1 = tpu.memref_slice %arg0[%c0_i32_1, %c0_i32_2] : memref<8x128xf32, #tpu.memory_space<any>> -> memref<8x128xf32, #tpu.memory_space<any>>
    tpu.wait_dma2 semaphore(%arg2 : memref<!tpu.dma_semaphore, #tpu.memory_space<semaphore_mem>>) src(%1 : memref<8x128xf32, #tpu.memory_space<any>>) dst(%arg1 : memref<8x128xf32, #tpu.memory_space<any>>)
    return
  }
}

</mosaic_0001>

<llo_original>
// kernel: tpu_custom_call.1
$region0: #{tpu_custom_call.1}
  #allocation0 [shape = 'u32[]', space=smem, size = 0x4, offset = 0x4, fixed_abs, tag = 'smem constant byte address 0x4 - core index']
  #allocation1 [shape = 'u32[72,128]{1,0:T(1,128)}', space=vmem, size = 0x9000, scoped, tag = 'internal scratch']
  #allocation2 [shape = 's32[1]{0}', space=sflag, size = 0x4, scoped, tag = 'scratch operand']
  #allocation3 [shape = 's32[]', space=sflag, size = 0x4, offset = 0, fixed_abs, tag = 'sflag constant byte address 0x0 - dummy sync flag']
  #allocation4 [shape = 'u32[0]{0}', space=smem, size = 0, offset = 0, fixed_abs, tag = 'smem constant byte address 0x0 - null']
  %s0 = inlined_call_operand.hbm [shape: f32[8,128], index: 0, kind: input, shape index: {}]
  %s1 = inlined_call_operand.hbm [shape: f32[8,128], index: 1, kind: output, shape index: {}]
  %s2 = sld [smem:[#allocation0]]
  $region2: #{tpu_custom_call.1} parent=0
    _
  %s4 = ssub.s32 1, %s2
  %s5 = scalar_select 0, %s4, %s2
  %s7 = sshll.u32 1, 14
  %s8 = sxor.u32 4294967295, %s7
  %s10 = sshll.u32 %s0, 4
  %s11 = int_to_ptr.hbm [resolvable:$true] %s10
  %s12 = sshll.u32 %s1, 4
  %s13 = int_to_ptr.hbm [resolvable:$true] %s12
  %16 = dma.general %s11, 128, %s13, [#allocation2], [#allocation3], [#allocation4], 0, 0
  %s17 = smul.u32 8, 1
  %s18 = sshll.u32 %s17, 4
  %19 = dma.done [#allocation2], %s18
  %20 = vsyncmov [#allocation2]
  %s21 = vpop.sfrf %20
  %p22 = scmp.eq.s32.totalorder %s21, 0
  %p23 = pneg %p22
  %25 = shalt.err (%p23)

</llo_original>
